<compile_context>
chip_gen: v7x
topology: tpu7x:2x2x1
jax: 0.10.0
libtpu: 0.0.40
codegen_flags: <defaults>
</compile_context>

<pallas_src>
import jax
import jax.numpy as jnp
from jax.experimental import pallas as pl
from jax.experimental.pallas import tpu as pltpu


IN_FEATURES = 100
HIDDEN = 50
NUM_CLASSES = 5
_TB_MAX = 4096  # rows per batch tile; lane-padded f32 footprint at 4096 stays well under 32 MiB


def _make_kernel(n_parties):
    """One batch tile: out = concat(x_0..x_{n-1}) @ Wc + bc  (single fused affine, one MXU pass)."""

    def kernel(*refs):
        xs = refs[:n_parties]
        wc_ref = refs[n_parties]
        bc_ref = refs[n_parties + 1]
        o_ref = refs[n_parties + 2]

        if n_parties == 1:
            x = xs[0][...]
        else:
            # In-register lane concat (never materialized in HBM); fuses the per-party matmuls
            # into a single MXU stream over the 100-wide contraction.
            x = jnp.concatenate([r[...] for r in xs], axis=-1)

        acc = jnp.dot(x, wc_ref[...], preferred_element_type=jnp.float32)  # (tb, 5) f32
        o_ref[...] = (acc + bc_ref[...]).astype(o_ref.dtype)

    return kernel


def fuse_affine(params):
    """Collapse linear1 -> classifier into a single affine map. Exact (no nonlinearity between
    the layers), but changes float rounding order vs. the two-GEMM original — fine for inference.
    Call once and reuse; do NOT recompute per forward call."""
    w1 = params["w1"].astype(jnp.float32)                 # (100, 50), stored (in, out)
    b1 = params["b1"].astype(jnp.float32)                 # (50,)
    w2 = params["w2"].astype(jnp.float32)                 # (50, 5)
    b2 = params["b2"].astype(jnp.float32)                 # (5,)
    wc = w1 @ w2                                          # (100, 5)
    bc = (b1 @ w2 + b2).reshape(1, NUM_CLASSES)           # (1, 5)
    return wc, bc


def _round_up(a, m):
    return ((a + m - 1) // m) * m


def global_model_forward(input_list, wc, bc):
    """Forward pass matching GlobalModelForNUSWIDE.forward.

    input_list: sequence of (B, f_i) arrays (any #parties >= 1) with sum(f_i) == 100, all the
                same dtype (f32 or bf16 — bf16 is passed straight through, halving HBM traffic).
    wc, bc: fused affine from fuse_affine(params).
    Jit this function (shapes are static under jit) so dispatch overhead is amortized.
    """
    xs = list(input_list)
    n_parties = len(xs)
    feats = [int(x.shape[1]) for x in xs]
    assert sum(feats) == IN_FEATURES, f"expected {IN_FEATURES} total features, got {sum(feats)}"
    x_dtype = xs[0].dtype
    for x in xs:
        assert x.dtype == x_dtype, "all party tensors must share a dtype"
    B = int(xs[0].shape[0])

    is_bf16 = jnp.dtype(x_dtype) == jnp.dtype(jnp.bfloat16)
    sub = 16 if is_bf16 else 8            # sublane packing granularity

    # Batch tiling (no padding, no extra HBM copies):
    #  * tiny batch  -> single full-extent block (legal for any B, even non-multiples of 8)
    #  * otherwise   -> >= 2 grid steps (so the "parallel" axis really splits across v7x's 2 TCs),
    #                   tile capped at _TB_MAX rows; the ragged last block is handled by Pallas
    #                   and its out-of-bounds rows are row-independent and never written back.
    if B <= 2 * sub:
        tb = B
    else:
        tb = min(_round_up(pl.cdiv(B, 2), sub), _TB_MAX)
    grid = (pl.cdiv(B, tb),)

    # Weights: bf16 stream if activations are bf16, else f32. Bias stays f32 (added to f32 acc).
    wc = wc.astype(jnp.bfloat16 if is_bf16 else jnp.float32)
    bc = bc.astype(jnp.float32)
    out_dtype = x_dtype

    in_specs = (
        # Party inputs: pipelined batch tiles (the torch.cat is never materialized in HBM).
        [pl.BlockSpec((tb, f), lambda i: (i, 0)) for f in feats]
        # Fused weight + bias: constant index_map -> VMEM-resident, DMA'd once.
        + [pl.BlockSpec((IN_FEATURES, NUM_CLASSES), lambda i: (0, 0)),
           pl.BlockSpec((1, NUM_CLASSES), lambda i: (0, 0))]
    )
    out_specs = pl.BlockSpec((tb, NUM_CLASSES), lambda i: (i, 0))

    cost = pl.CostEstimate(
        flops=2 * B * IN_FEATURES * NUM_CLASSES,
        transcendentals=0,
        bytes_accessed=(
            B * IN_FEATURES * jnp.dtype(x_dtype).itemsize
            + B * NUM_CLASSES * jnp.dtype(out_dtype).itemsize
            + (IN_FEATURES + 1) * NUM_CLASSES * jnp.dtype(wc.dtype).itemsize
        ),
    )

    out = pl.pallas_call(
        _make_kernel(n_parties),
        out_shape=jax.ShapeDtypeStruct((B, NUM_CLASSES), out_dtype),
        grid=grid,
        in_specs=in_specs,
        out_specs=out_specs,
        compiler_params=pltpu.CompilerParams(
            dimension_semantics=("parallel",),      # batch tiles are independent -> megacore split
            vmem_limit_bytes=32 * 1024 * 1024,      # lane-padded footprint at tb=4096 is ~12-16 MiB
        ),
        cost_estimate=cost,
    )(*xs, wc, bc)
    return out


def init_params(key):
    # PyTorch default Linear init: U(-1/sqrt(fan_in), 1/sqrt(fan_in)) for weight and bias.
    k1, k2, k3, k4 = jax.random.split(key, 4)
    bound1 = 1.0 / jnp.sqrt(IN_FEATURES)
    bound2 = 1.0 / jnp.sqrt(HIDDEN)
    # Weights stored transposed to (in, out) so the kernel computes x @ W.
    w1 = (jax.random.uniform(k1, (IN_FEATURES, HIDDEN), jnp.float32) * 2.0 - 1.0) * bound1
    b1 = (jax.random.uniform(k2, (HIDDEN,), jnp.float32) * 2.0 - 1.0) * bound1
    w2 = (jax.random.uniform(k3, (HIDDEN, NUM_CLASSES), jnp.float32) * 2.0 - 1.0) * bound2
    b2 = (jax.random.uniform(k4, (NUM_CLASSES,), jnp.float32) * 2.0 - 1.0) * bound2
    return {"w1": w1, "b1": b1, "w2": w2, "b2": b2}


def _reference(xs, params):
    # Pure-JAX reference in the original (uncollapsed) two-layer form.
    x_full = jnp.concatenate(xs, axis=1)
    return (x_full @ params["w1"] + params["b1"]) @ params["w2"] + params["b2"]


if __name__ == "__main__":
    key = jax.random.PRNGKey(0)
    pkey, k1, k2, k3, k4 = jax.random.split(key, 5)

    params = init_params(pkey)
    wc, bc = fuse_affine(params)           # hoisted: computed once, reused for every forward call
    fwd = jax.jit(global_model_forward)

    # Two parties' features (image / text splits of NUS-WIDE) that concat to 100 dims.
    B = 4
    xa = jax.random.normal(k1, (B, 60), jnp.float32)
    xb = jax.random.normal(k2, (B, 40), jnp.float32)
    out = jax.block_until_ready(fwd([xa, xb], wc, bc))
    ref = _reference([xa, xb], params)
    assert out.shape == (B, NUM_CLASSES)
    assert jnp.allclose(out, ref, atol=2e-4, rtol=2e-4), float(jnp.max(jnp.abs(out - ref)))

    # Second shape: exercises the pad-free cdiv grid (2 steps, ragged last batch tile).
    B2 = 40
    xc = jax.random.normal(k3, (B2, 60), jnp.float32)
    xd = jax.random.normal(k4, (B2, 40), jnp.float32)
    out2 = jax.block_until_ready(fwd([xc, xd], wc, bc))
    ref2 = _reference([xc, xd], params)
    assert out2.shape == (B2, NUM_CLASSES)
    assert jnp.allclose(out2, ref2, atol=2e-4, rtol=2e-4), float(jnp.max(jnp.abs(out2 - ref2)))

    print("KERNEL_OK")
</pallas_src>

<mosaic_0001>
module attributes {stable_mosaic.version = 11 : i64} {
  func.func @kernel(%arg0: i32, %arg1: memref<4x60xf32, #tpu.memory_space<vmem>>, %arg2: memref<4x40xf32, #tpu.memory_space<vmem>>, %arg3: memref<100x5xf32, #tpu.memory_space<vmem>>, %arg4: memref<1x5xf32, #tpu.memory_space<vmem>>, %arg5: memref<4x5xf32, #tpu.memory_space<vmem>>) attributes {dimension_semantics = [#tpu.dimension_semantics<parallel>], iteration_bounds = array<i64: 1>, scalar_prefetch = 0 : i64, scratch_operands = 0 : i64, tpu.core_type = #tpu.core_type<tc>, window_params = [{transform_indices = @transform_0, window_bounds = array<i64: 4, 60>}, {transform_indices = @transform_1, window_bounds = array<i64: 4, 40>}, {pipeline_mode = #tpu.pipeline_mode<synchronous>, transform_indices = @transform_2, window_bounds = array<i64: 100, 5>}, {pipeline_mode = #tpu.pipeline_mode<synchronous>, transform_indices = @transform_3, window_bounds = array<i64: 1, 5>}, {transform_indices = @transform_4, window_bounds = array<i64: 4, 5>}]} {
    %c0 = arith.constant 0 : index
    %c0_0 = arith.constant 0 : index
    %0 = vector.load %arg1[%c0, %c0_0] : memref<4x60xf32, #tpu.memory_space<vmem>>, vector<4x60xf32>
    %c0_1 = arith.constant 0 : index
    %c0_2 = arith.constant 0 : index
    %1 = vector.load %arg2[%c0_1, %c0_2] : memref<4x40xf32, #tpu.memory_space<vmem>>, vector<4x40xf32>
    %2 = tpu.concatenate %0, %1 in 1 : vector<4x60xf32>, vector<4x40xf32> -> vector<4x100xf32>
    %c0_3 = arith.constant 0 : index
    %c0_4 = arith.constant 0 : index
    %3 = vector.load %arg3[%c0_3, %c0_4] : memref<100x5xf32, #tpu.memory_space<vmem>>, vector<100x5xf32>
    %cst = arith.constant dense<0.000000e+00> : vector<4x5xf32>
    %4 = tpu.matmul %2, %3, %cst {dimension_numbers = #tpu.dot_dimension_numbers<[1], [0], [0], [1], [0, 0, 1, 1], [], []>} : vector<4x100xf32>, vector<100x5xf32>, vector<4x5xf32> -> vector<4x5xf32>
    %c0_5 = arith.constant 0 : index
    %c0_6 = arith.constant 0 : index
    %5 = vector.load %arg4[%c0_5, %c0_6] : memref<1x5xf32, #tpu.memory_space<vmem>>, vector<1x5xf32>
    %6 = vector.broadcast %5 : vector<1x5xf32> to vector<4x5xf32>
    %7 = arith.addf %4, %6 : vector<4x5xf32>
    %c0_7 = arith.constant 0 : index
    %c0_8 = arith.constant 0 : index
    %8 = vector.load %arg5[%c0_7, %c0_8] : memref<4x5xf32, #tpu.memory_space<vmem>>, vector<4x5xf32>
    tpu.vector_store %arg5[%c0_7, %c0_8], %7 {strides = array<i32>} : memref<4x5xf32, #tpu.memory_space<vmem>>, vector<4x5xf32>,
    return
  }
  func.func @transform_0(%arg0: i32) -> (i32, i32) {
    %c0_i32 = arith.constant 0 : i32
    %c0_i32_0 = arith.constant 0 : i32
    return %arg0, %c0_i32 : i32, i32
  }
  func.func @transform_1(%arg0: i32) -> (i32, i32) {
    %c0_i32 = arith.constant 0 : i32
    %c0_i32_0 = arith.constant 0 : i32
    return %arg0, %c0_i32 : i32, i32
  }
  func.func @transform_2(%arg0: i32) -> (i32, i32) {
    %c0_i32 = arith.constant 0 : i32
    %c0_i32_0 = arith.constant 0 : i32
    %c0_i32_1 = arith.constant 0 : i32
    return %c0_i32, %c0_i32_0 : i32, i32
  }
  func.func @transform_3(%arg0: i32) -> (i32, i32) {
    %c0_i32 = arith.constant 0 : i32
    %c0_i32_0 = arith.constant 0 : i32
    %c0_i32_1 = arith.constant 0 : i32
    return %c0_i32, %c0_i32_0 : i32, i32
  }
  func.func @transform_4(%arg0: i32) -> (i32, i32) {
    %c0_i32 = arith.constant 0 : i32
    %c0_i32_0 = arith.constant 0 : i32
    return %arg0, %c0_i32 : i32, i32
  }
}

</mosaic_0001>

<llo_original>
// kernel: global_model_forward.1
$region0: #{global_model_forward.1}
  #allocation0 [shape = 'u32[]', space=smem, size = 0x4, offset = 0x4, fixed_abs, tag = 'smem constant byte address 0x4 - core index']
  #allocation1 [shape = 'u32[144,128]{1,0:T(1,128)}', space=vmem, size = 0x12000, scoped, tag = 'internal scratch']
  %s0 = inlined_call_operand.vmem [shape: f32[4,60], index: 0, kind: input, shape index: {}]
  %s1 = inlined_call_operand.vmem [shape: f32[4,40], index: 1, kind: input, shape index: {}]
  %s2 = inlined_call_operand.vmem [shape: f32[100,5], index: 2, kind: input, shape index: {}]
  %s3 = inlined_call_operand.vmem [shape: f32[1,5], index: 3, kind: input, shape index: {}]
  %s4 = inlined_call_operand.hbm [shape: f32[4,5], index: 4, kind: output, shape index: {}]
  %s5 = sld [smem:[#allocation0]]
  $region26: #{global_model_forward.1} parent=0
    _
  %s7 = ssub.s32 1, %s5
  %s8 = scalar_select 0, %s7, %s5
  $region1: #{global_model_forward.1} parent=0
    #allocation2 [shape = 'u8[2048]{0}', space=vmem, size = 0x800, scoped, tag = 'output window, operand 0, single buffered']
    #allocation3 [shape = 's32[1]{0}', space=sflag, size = 0x4, scoped, tag = 'scoped memory for global_model_forward.1']
    %9 = vsyncpa [#allocation3], 0
    // Predicated region
    $region2: #{global_model_forward.1} parent=1 // pred_check
      _
    $region3: #{global_model_forward.1} parent=1 // pred_check_branch
      %11 = sbr.rel (0) target = $region5
    $region4: #{global_model_forward.1} parent=1 // pred_region
      _
    $region5: #{global_model_forward.1} parent=1 // pred_fallthru
      _
    // Predicated region
    $region6: #{global_model_forward.1} parent=1 // pred_check
      _
    $region7: #{global_model_forward.1} parent=1 // pred_check_branch
      %13 = sbr.rel (0) target = $region9
    $region8: #{global_model_forward.1} parent=1 // pred_region
      _
    $region9: #{global_model_forward.1} parent=1 // pred_fallthru
      _
    // Predicated region
    $region10: #{global_model_forward.1} parent=1 // pred_check
      _
    $region11: #{global_model_forward.1} parent=1 // pred_check_branch
      %15 = sbr.rel (0) target = $region13
    $region12: #{global_model_forward.1} parent=1 // pred_region
      _
    $region13: #{global_model_forward.1} parent=1 // pred_fallthru
      _
    // Predicated region
    $region14: #{global_model_forward.1} parent=1 // pred_check
      _
    $region15: #{global_model_forward.1} parent=1 // pred_check_branch
      %17 = sbr.rel (0) target = $region17
    $region16: #{global_model_forward.1} parent=1 // pred_region
      _
    $region17: #{global_model_forward.1} parent=1 // pred_fallthru
      _
    %v18 = vld [vmem:[%s0] sm:$0xf]
    %v19 = vld [vmem:[%s1] sm:$0xf]
    %21 = vrot.lane.b32.xlu0 %v19, 60
    %v22 = vpop.permute.xlu0 %21
    %vm24 = vcmask 490496
    %v25 = vsel %vm24, %v18, %v22
    %v26 = vld [vmem:[%s2] sm:$0xff]
    %v27 = vld [vmem:[%s2 + $0x8] sm:$0xff]
    %v28 = vld [vmem:[%s2 + $0x10] sm:$0xff]
    %v29 = vld [vmem:[%s2 + $0x18] sm:$0xff]
    %v30 = vld [vmem:[%s2 + $0x20] sm:$0xff]
    %v31 = vld [vmem:[%s2 + $0x28] sm:$0xff]
    %v32 = vld [vmem:[%s2 + $0x30] sm:$0xff]
    %v33 = vld [vmem:[%s2 + $0x38] sm:$0xff]
    %v34 = vld [vmem:[%s2 + $0x40] sm:$0xff]
    %v35 = vld [vmem:[%s2 + $0x48] sm:$0xff]
    %v36 = vld [vmem:[%s2 + $0x50] sm:$0xff]
    %v37 = vld [vmem:[%s2 + $0x58] sm:$0xff]
    %v38 = vld [vmem:[%s2 + $0x60] sm:$0xf]
    %v39 = vld [vmem:[%s3] sm:$0x1]
    %v41 = vlaneseq
    %v42 = vshrl.u32 %v41, 7
    %v43 = vsub.s32 0, %v42
    %v44 = vrot.slane %v39, %v43
    %vm46 = vcmask 818176
    %v48 = vsel %vm46, %v25, 0
    %vm50 = vcmask 1043456
    %v52 = vsel %vm50, %v38, 0
    %54 = vmatprep.subr.mxu0 0.0
    %55 = vmatpush1.msra.mxu0 %v26
    %56 = vmatprep.subr.mxu0 0.0
    %57 = vmatpush1.msra.mxu0 %v27
    %58 = vmatprep.subr.mxu0 0.0
    %59 = vmatpush1.msra.mxu0 %v28
    %60 = vmatprep.subr.mxu0 0.0
    %61 = vmatpush1.msra.mxu0 %v29
    %62 = vmatprep.subr.mxu0 0.0
    %63 = vmatpush1.msra.mxu0 %v30
    %64 = vmatprep.subr.mxu0 0.0
    %65 = vmatpush1.msra.mxu0 %v31
    %66 = vmatprep.subr.mxu0 0.0
    %67 = vmatpush1.msra.mxu0 %v32
    %68 = vmatprep.subr.mxu0 0.0
    %69 = vmatpush1.msra.mxu0 %v33
    %70 = vmatprep.subr.mxu0 0.0
    %71 = vmatpush1.msra.mxu0 %v34
    %72 = vmatprep.subr.mxu0 0.0
    %73 = vmatpush1.msra.mxu0 %v35
    %74 = vmatprep.subr.mxu0 0.0
    %75 = vmatpush1.msra.mxu0 %v36
    %76 = vmatprep.subr.mxu0 0.0
    %77 = vmatpush1.msra.mxu0 %v37
    %78 = vmatprep.subr.mxu0 0.0
    %79 = vmatpush1.msra.mxu0 %v52
    %80 = vmatprep.subr.mxu0 0.0
    %81 = vmatpush1.msra.mxu0 0.0
    %82 = vmatprep.subr.mxu0 0.0
    %83 = vmatpush1.msra.mxu0 0.0
    %84 = vmatprep.subr.mxu0 0.0
    %85 = vmatpush1.msra.mxu0 0.0
    %86 = vmatprep.subr.mxu0 0.0
    %87 = vmatpush1.msra.mxu0 0.0
    %88 = vmatprep.subr.mxu0 0.0
    %89 = vmatpush1.msra.mxu0 0.0
    %90 = vmatprep.subr.mxu0 0.0
    %91 = vmatpush1.msra.mxu0 0.0
    %92 = vmatprep.subr.mxu0 0.0
    %93 = vmatpush1.msra.mxu0 0.0
    %94 = vmatprep.subr.mxu0 0.0
    %95 = vmatpush1.msra.mxu0 0.0
    %96 = vmatprep.subr.mxu0 0.0
    %97 = vmatpush1.msra.mxu0 0.0
    %98 = vmatprep.subr.mxu0 0.0
    %99 = vmatpush1.msra.mxu0 0.0
    %100 = vmatprep.subr.mxu0 0.0
    %101 = vmatpush1.msra.mxu0 0.0
    %102 = vmatprep.subr.mxu0 0.0
    %103 = vmatpush1.msra.mxu0 0.0
    %104 = vmatprep.subr.mxu0 0.0
    %105 = vmatpush1.msra.mxu0 0.0
    %106 = vmatprep.subr.mxu0 0.0
    %107 = vmatpush1.msra.mxu0 0.0
    %108 = vmatprep.subr.mxu0 0.0
    %109 = vmatpush1.msra.mxu0 0.0
    %110 = vmatprep.subr.mxu0 0.0
    %111 = vmatpush1.msra.mxu0 0.0
    %112 = vmatprep.subr.mxu0 0.0
    %113 = vmatpush1.msra.mxu0 0.0
    %114 = vmatprep.subr.mxu0 0.0
    %115 = vmatpush1.msra.mxu0 0.0
    %116 = vmatprep.subr.mxu0 0.0
    %117 = vmatpush1.msra.mxu0 0.0
    %118 = vmatprep.mubr.f32.mxu0 0.0
    %119 = vmatmul.mubr.f32.gmra.mrb[0].mxu0 %v48
    %v120 = vpop.f32.mrb[0].mxu0
    %v121 = vadd.f32 %v44, %v120
    %v122 = vpop.f32.mrb[0].mxu0
    %123 = vdwg.mxu0
    %vm124 = vcmask 35840
    %125 = vst.msk [vmem:[#allocation2] sm:$0xf] %vm124, %v121
    // Predicated region
    $region18: #{global_model_forward.1} parent=1 // pred_check
      _
    $region19: #{global_model_forward.1} parent=1 // pred_check_branch
      %127 = sbr.rel (0) target = $region21
    $region20: #{global_model_forward.1} parent=1 // pred_region
      %s129 = ssub.s32 64, 64
      %130 = vsyncadd [#allocation3], %s129
      %s132 = sshll.u32 [#allocation2], 4
      %s133 = int_to_ptr.vmem [resolvable:$true] %s132
      %135 = dma.vmem_to_hbm [thread:$0]  %s133, 64, %s4, [#allocation3]
    $region21: #{global_model_forward.1} parent=1 // pred_fallthru
      _
    // Predicated region
    $region22: #{global_model_forward.1} parent=1 // pred_check
      _
    $region23: #{global_model_forward.1} parent=1 // pred_check_branch
      %137 = sbr.rel (0) target = $region25
    $region24: #{global_model_forward.1} parent=1 // pred_region
      %138 = dma.done [#allocation3], 64
    $region25: #{global_model_forward.1} parent=1 // pred_fallthru
      _
    %139 = vsyncpa [#allocation3], 1

</llo_original>
